<compile_context>
chip_gen: v7x
topology: tpu7x:2x2x1
jax: 0.10.0
libtpu: 0.0.40
codegen_flags: <defaults>
</compile_context>

<pallas_src>
from functools import partial

import jax
import jax.numpy as jnp
from jax.experimental import pallas as pl
from jax.experimental.pallas import tpu as pltpu

LANES = 128
SUBLANES = 8


def mlp_kernel(numHide, numNodes, chunk_rows, p_ref, x_ref, out_ref):
    """One (block_rows, 128) slab of samples.

    p_ref   : (P,) f32 SMEM — flat packed [w0, b0, (Wh_i, bh_i)*numHide, wL, bL]
    x_ref   : (block_rows, 128) f32 VMEM — samples, sublane+lane dense
    out_ref : (block_rows, 128) f32 VMEM
    """
    # ---- Read every parameter ONCE from SMEM (loop-invariant scalars). ----
    idx = [0]

    def rd():
        v = p_ref[idx[0]]
        idx[0] += 1
        return v

    w0 = [rd() for _ in range(numNodes)]
    b0 = [rd() for _ in range(numNodes)]
    Wh, bh = [], []
    for _ in range(numHide):
        # Wh[l][k][j]: input node k -> output node j ((in, out) row-major pack order).
        Wh.append([[rd() for _ in range(numNodes)] for _ in range(numNodes)])
        bh.append([rd() for _ in range(numNodes)])
    wL = [rd() for _ in range(numNodes)]
    bL = rd()

    block_rows = x_ref.shape[0]
    n_chunks = block_rows // chunk_rows          # exact by construction in the wrapper

    # ---- Register-resident chunk loop over the sublane (row) axis. ----
    @pl.loop(0, n_chunks)
    def _(c):
        r0 = pl.multiple_of(c * chunk_rows, chunk_rows)
        x = x_ref[pl.ds(r0, chunk_rows), :]      # (chunk_rows, 128)

        # Layer 0: Linear(1, numNodes) — NO sigmoid (in_features == 1).
        h = [w0[j] * x + b0[j] for j in range(numNodes)]

        # Hidden layers: Linear(numNodes, numNodes) + Sigmoid. Static Python unroll.
        for l in range(numHide):
            new_h = []
            for j in range(numNodes):
                acc = Wh[l][0][j] * h[0]
                for k in range(1, numNodes):
                    acc = acc + Wh[l][k][j] * h[k]
                z = acc + bh[l][j]
                # sigmoid(z) == 0.5 * tanh(0.5 * z) + 0.5  -> single EUP transcendental.
                # (Optional pack-time constant folding left out — kernel is HBM-bound
                #  after the layout fix.)
                new_h.append(0.5 * jnp.tanh(0.5 * z) + 0.5)
            h = new_h

        # Final layer: Linear(numNodes, 1) — NO sigmoid (out_features == 1).
        acc = wL[0] * h[0]
        for k in range(1, numNodes):
            acc = acc + wL[k] * h[k]
        out_ref[pl.ds(r0, chunk_rows), :] = acc + bL


def _round_up(n, m):
    return ((n + m - 1) // m) * m


def pack_params(params, numHide):
    """Flatten params in exactly the order mlp_kernel reads them."""
    w0, b0, wh, bh, wL, bL = params
    parts = [w0.reshape(-1), b0.reshape(-1)]
    for i in range(numHide):
        parts.append(wh[i].reshape(-1))   # (in, out) row-major == kernel's k-major read order
        parts.append(bh[i].reshape(-1))
    parts.append(wL.reshape(-1))
    parts.append(bL.reshape(-1))
    return jnp.concatenate(parts).astype(jnp.float32)


def ext_net_sigmoid_forward(x, params, numHide, numNodes, chunk_rows=64):
    """x: (N, 1) or (N,) float. Returns (N, 1) float32.

    chunk_rows: rows per register-resident inner chunk (multiple of 8). 64 rows x 128
    lanes = 8 vregs per live array — fits the 64-vreg file for small numNodes; shrink
    for larger numNodes.
    """
    p_flat = pack_params(params, numHide)

    x_flat = jnp.asarray(x, jnp.float32).reshape(-1)
    N = x_flat.shape[0]

    # Pad only to the (8, 128) = 1024-element layout granularity, then lay samples out
    # sublane+lane dense as (R, 128).
    N_pad = _round_up(N, SUBLANES * LANES)
    R = N_pad // LANES                                     # multiple of 8
    x2d = jnp.pad(x_flat, (0, N_pad - N)).reshape(R, LANES)

    if R <= chunk_rows:
        chunk = R                                          # single chunk, single block
        block_rows = R
    else:
        assert chunk_rows % SUBLANES == 0, "chunk_rows must be a multiple of 8"
        chunk = chunk_rows
        # Cap blocks at ~2 MiB f32 (4096 rows x 128 lanes); double-buffered x+out = 8 MiB,
        # within the scoped-VMEM default on v5e/v6e/v7x. Aim for >= 2 grid steps so the
        # "parallel" axis can shard blocks over v7x's two TensorCores.
        cap_rows = max(chunk, (4096 // chunk) * chunk)
        block_rows = min(cap_rows, _round_up(pl.cdiv(R, 2), chunk))

    grid = pl.cdiv(R, block_rows)                          # partial last block is masked

    out2d = pl.pallas_call(
        partial(mlp_kernel, numHide, numNodes, chunk),
        out_shape=jax.ShapeDtypeStruct((R, LANES), jnp.float32),
        grid_spec=pltpu.PrefetchScalarGridSpec(
            num_scalar_prefetch=0,
            grid=(grid,),
            in_specs=[
                pl.BlockSpec(memory_space=pltpu.MemorySpace.SMEM),   # flat packed weights
                pl.BlockSpec((block_rows, LANES), lambda i: (i, 0)), # contiguous sample slab
            ],
            out_specs=pl.BlockSpec((block_rows, LANES), lambda i: (i, 0)),
        ),
        compiler_params=pltpu.CompilerParams(
            dimension_semantics=("parallel",),             # shard blocks over v7x's 2 TCs
        ),
    )(p_flat, x2d)

    return out2d.reshape(-1)[:N].reshape(N, 1)


def init_params(key, numHide, numNodes):
    """Deterministic PyTorch-style init: U(-1/sqrt(fan_in), 1/sqrt(fan_in))."""

    def linear(kw, kb, fan_in, fan_out):
        bound = 1.0 / (fan_in ** 0.5)
        W = jax.random.uniform(kw, (fan_in, fan_out), jnp.float32, -bound, bound)
        b = jax.random.uniform(kb, (1, fan_out), jnp.float32, -bound, bound)
        return W, b

    keys = jax.random.split(key, 2 * (numHide + 2))
    w0, b0 = linear(keys[0], keys[1], 1, numNodes)               # Linear(1, numNodes)
    whs, bhs = [], []
    for i in range(numHide):                                     # Linear(numNodes, numNodes)
        W, b = linear(keys[2 + 2 * i], keys[3 + 2 * i], numNodes, numNodes)
        whs.append(W)
        bhs.append(b)
    if numHide > 0:
        wh = jnp.stack(whs, axis=0)                              # (numHide, numNodes, numNodes)
        bh = jnp.stack(bhs, axis=0)                              # (numHide, 1, numNodes)
    else:
        wh = jnp.zeros((0, numNodes, numNodes), jnp.float32)
        bh = jnp.zeros((0, 1, numNodes), jnp.float32)
    wL, bL = linear(keys[-2], keys[-1], numNodes, 1)             # Linear(numNodes, 1)
    return (w0, b0, wh, bh, wL, bL)


def reference_forward(x, params, numHide):
    w0, b0, wh, bh, wL, bL = params
    h = jnp.asarray(x, jnp.float32) @ w0 + b0      # no activation (in_features == 1)
    for i in range(numHide):
        h = jax.nn.sigmoid(h @ wh[i] + bh[i])
    return h @ wL + bL                             # no activation (out_features == 1)


if __name__ == "__main__":
    key = jax.random.PRNGKey(0)

    # --- Config matching the module defaults / original script (n_samples = 30) --------
    numHide, numNodes = 1, 2
    n_samples = 30
    k_x, k_p, k_x2, k_p2 = jax.random.split(key, 4)

    # x = sort(2 * rand(n_samples) - 1), shaped (N, 1) like the PyTorch script's input.
    x = jnp.sort(2.0 * jax.random.uniform(k_x, (n_samples,)) - 1.0).reshape(n_samples, 1)
    x = x.astype(jnp.float32)
    params = init_params(k_p, numHide, numNodes)

    out = jax.block_until_ready(ext_net_sigmoid_forward(x, params, numHide, numNodes))
    ref = reference_forward(x, params, numHide)
    assert out.shape == (n_samples, 1), out.shape
    assert jnp.allclose(out, ref, rtol=1e-5, atol=1e-5), (out, ref)

    # --- Larger config exercising multi-block grid, partial boundary block, and the ----
    # --- multi-chunk inner loop (N not a block multiple) --------------------------------
    numHide2, numNodes2, n2 = 3, 2, 2500
    x2 = (2.0 * jax.random.uniform(k_x2, (n2, 1)) - 1.0).astype(jnp.float32)
    params2 = init_params(k_p2, numHide2, numNodes2)
    out2 = jax.block_until_ready(
        ext_net_sigmoid_forward(x2, params2, numHide2, numNodes2, chunk_rows=8))
    ref2 = reference_forward(x2, params2, numHide2)
    assert out2.shape == (n2, 1), out2.shape
    assert jnp.allclose(out2, ref2, rtol=1e-5, atol=1e-5), (out2, ref2)

    print("KERNEL_OK")
</pallas_src>

<mosaic_0001>
module attributes {stable_mosaic.version = 11 : i64} {
  func.func @mlp_kernel(%arg0: i32, %arg1: memref<13xf32, #tpu.memory_space<smem>>, %arg2: memref<8x128xf32, #tpu.memory_space<vmem>>, %arg3: memref<8x128xf32, #tpu.memory_space<vmem>>) attributes {dimension_semantics = [#tpu.dimension_semantics<parallel>], iteration_bounds = array<i64: 1>, scalar_prefetch = 0 : i64, scratch_operands = 0 : i64, tpu.core_type = #tpu.core_type<tc>, window_params = [{transform_indices = @transform_0, window_bounds = array<i64: 13>}, {transform_indices = @transform_1, window_bounds = array<i64: 8, 128>}, {transform_indices = @transform_2, window_bounds = array<i64: 8, 128>}]} {
    %c0 = arith.constant 0 : index
    %0 = memref.load %arg1[%c0] : memref<13xf32, #tpu.memory_space<smem>>
    %c1 = arith.constant 1 : index
    %1 = memref.load %arg1[%c1] : memref<13xf32, #tpu.memory_space<smem>>
    %c2 = arith.constant 2 : index
    %2 = memref.load %arg1[%c2] : memref<13xf32, #tpu.memory_space<smem>>
    %c3 = arith.constant 3 : index
    %3 = memref.load %arg1[%c3] : memref<13xf32, #tpu.memory_space<smem>>
    %c4 = arith.constant 4 : index
    %4 = memref.load %arg1[%c4] : memref<13xf32, #tpu.memory_space<smem>>
    %c5 = arith.constant 5 : index
    %5 = memref.load %arg1[%c5] : memref<13xf32, #tpu.memory_space<smem>>
    %c6 = arith.constant 6 : index
    %6 = memref.load %arg1[%c6] : memref<13xf32, #tpu.memory_space<smem>>
    %c7 = arith.constant 7 : index
    %7 = memref.load %arg1[%c7] : memref<13xf32, #tpu.memory_space<smem>>
    %c8 = arith.constant 8 : index
    %8 = memref.load %arg1[%c8] : memref<13xf32, #tpu.memory_space<smem>>
    %c9 = arith.constant 9 : index
    %9 = memref.load %arg1[%c9] : memref<13xf32, #tpu.memory_space<smem>>
    %c10 = arith.constant 10 : index
    %10 = memref.load %arg1[%c10] : memref<13xf32, #tpu.memory_space<smem>>
    %c11 = arith.constant 11 : index
    %11 = memref.load %arg1[%c11] : memref<13xf32, #tpu.memory_space<smem>>
    %c12 = arith.constant 12 : index
    %12 = memref.load %arg1[%c12] : memref<13xf32, #tpu.memory_space<smem>>
    %c0_i32 = arith.constant 0 : i32
    %c1_i32 = arith.constant 1 : i32
    %13 = arith.muli %c0_i32, %c1_i32 : i32
    %c0_i32_0 = arith.constant 0 : i32
    %14 = arith.addi %c0_i32_0, %13 : i32
    %c8_i32 = arith.constant 8 : i32
    %15 = arith.muli %14, %c8_i32 : i32
    %16 = tpu.assume_multiple %15, 8 : i32
    %17 = arith.index_cast %16 : i32 to index
    %c0_1 = arith.constant 0 : index
    %18 = vector.load %arg2[%17, %c0_1] : memref<8x128xf32, #tpu.memory_space<vmem>>, vector<8x128xf32>
    %19 = vector.broadcast %0 : f32 to vector<8x128xf32>
    %20 = arith.mulf %19, %18 : vector<8x128xf32>
    %21 = vector.broadcast %2 : f32 to vector<8x128xf32>
    %22 = arith.addf %20, %21 : vector<8x128xf32>
    %23 = vector.broadcast %1 : f32 to vector<8x128xf32>
    %24 = arith.mulf %23, %18 : vector<8x128xf32>
    %25 = vector.broadcast %3 : f32 to vector<8x128xf32>
    %26 = arith.addf %24, %25 : vector<8x128xf32>
    %27 = vector.broadcast %4 : f32 to vector<8x128xf32>
    %28 = arith.mulf %27, %22 : vector<8x128xf32>
    %29 = vector.broadcast %6 : f32 to vector<8x128xf32>
    %30 = arith.mulf %29, %26 : vector<8x128xf32>
    %31 = arith.addf %28, %30 : vector<8x128xf32>
    %32 = vector.broadcast %8 : f32 to vector<8x128xf32>
    %33 = arith.addf %31, %32 : vector<8x128xf32>
    %cst = arith.constant 5.000000e-01 : f32
    %34 = vector.broadcast %cst : f32 to vector<8x128xf32>
    %35 = arith.mulf %34, %33 : vector<8x128xf32>
    %36 = math.tanh %35 : vector<8x128xf32>
    %cst_2 = arith.constant 5.000000e-01 : f32
    %37 = vector.broadcast %cst_2 : f32 to vector<8x128xf32>
    %38 = arith.mulf %37, %36 : vector<8x128xf32>
    %cst_3 = arith.constant 5.000000e-01 : f32
    %39 = vector.broadcast %cst_3 : f32 to vector<8x128xf32>
    %40 = arith.addf %38, %39 : vector<8x128xf32>
    %41 = vector.broadcast %5 : f32 to vector<8x128xf32>
    %42 = arith.mulf %41, %22 : vector<8x128xf32>
    %43 = vector.broadcast %7 : f32 to vector<8x128xf32>
    %44 = arith.mulf %43, %26 : vector<8x128xf32>
    %45 = arith.addf %42, %44 : vector<8x128xf32>
    %46 = vector.broadcast %9 : f32 to vector<8x128xf32>
    %47 = arith.addf %45, %46 : vector<8x128xf32>
    %cst_4 = arith.constant 5.000000e-01 : f32
    %48 = vector.broadcast %cst_4 : f32 to vector<8x128xf32>
    %49 = arith.mulf %48, %47 : vector<8x128xf32>
    %50 = math.tanh %49 : vector<8x128xf32>
    %cst_5 = arith.constant 5.000000e-01 : f32
    %51 = vector.broadcast %cst_5 : f32 to vector<8x128xf32>
    %52 = arith.mulf %51, %50 : vector<8x128xf32>
    %cst_6 = arith.constant 5.000000e-01 : f32
    %53 = vector.broadcast %cst_6 : f32 to vector<8x128xf32>
    %54 = arith.addf %52, %53 : vector<8x128xf32>
    %55 = vector.broadcast %10 : f32 to vector<8x128xf32>
    %56 = arith.mulf %55, %40 : vector<8x128xf32>
    %57 = vector.broadcast %11 : f32 to vector<8x128xf32>
    %58 = arith.mulf %57, %54 : vector<8x128xf32>
    %59 = arith.addf %56, %58 : vector<8x128xf32>
    %60 = vector.broadcast %12 : f32 to vector<8x128xf32>
    %61 = arith.addf %59, %60 : vector<8x128xf32>
    %62 = arith.index_cast %16 : i32 to index
    %c0_7 = arith.constant 0 : index
    %63 = vector.load %arg3[%62, %c0_7] : memref<8x128xf32, #tpu.memory_space<vmem>>, vector<8x128xf32>
    tpu.vector_store %arg3[%62, %c0_7], %61 {strides = array<i32>} : memref<8x128xf32, #tpu.memory_space<vmem>>, vector<8x128xf32>,
    %c1_i32_8 = arith.constant 1 : i32
    return
  }
  func.func @transform_0(%arg0: i32) -> i32 {
    %c0_i32 = arith.constant 0 : i32
    %c0_i32_0 = arith.constant 0 : i32
    return %c0_i32 : i32
  }
  func.func @transform_1(%arg0: i32) -> (i32, i32) {
    %c0_i32 = arith.constant 0 : i32
    %c0_i32_0 = arith.constant 0 : i32
    return %arg0, %c0_i32 : i32, i32
  }
  func.func @transform_2(%arg0: i32) -> (i32, i32) {
    %c0_i32 = arith.constant 0 : i32
    %c0_i32_0 = arith.constant 0 : i32
    return %arg0, %c0_i32 : i32, i32
  }
}

</mosaic_0001>

<llo_original>
// kernel: tpu_custom_call.1
$region0: #{tpu_custom_call.1}
  #allocation0 [shape = 'u32[]', space=smem, size = 0x4, offset = 0x4, fixed_abs, tag = 'smem constant byte address 0x4 - core index']
  #allocation1 [shape = 'u32[144,128]{1,0:T(1,128)}', space=vmem, size = 0x12000, scoped, tag = 'internal scratch']
  %s0 = inlined_call_operand.hbm [shape: f32[13], index: 0, kind: input, shape index: {}]
  %s1 = inlined_call_operand.hbm [shape: f32[8,128], index: 1, kind: input, shape index: {}]
  %s2 = inlined_call_operand.hbm [shape: f32[8,128], index: 2, kind: output, shape index: {}]
  %s3 = sld [smem:[#allocation0]]
  $region26: #{tpu_custom_call.1} parent=0
    _
  %s5 = ssub.s32 1, %s3
  %s6 = scalar_select 0, %s5, %s3
  $region1: #{tpu_custom_call.1} parent=0
    #allocation2 [shape = 'u8[512]{0}', space=smem, size = 0x200, scoped, tag = 'input window, operand 0, single buffered']
    #allocation3 [shape = 's32[1]{0}', space=sflag, size = 0x4, scoped, tag = 'scoped memory for tpu_custom_call.1']
    #allocation4 [shape = 's32[1]{0}', space=sflag, size = 0x4, scoped, tag = 'scoped memory for tpu_custom_call.1']
    #allocation5 [shape = 's32[1]{0}', space=sflag, size = 0x4, scoped, tag = 'scoped memory for tpu_custom_call.1']
    #allocation6 [shape = 'u8[4096]{0}', space=vmem, size = 0x1000, scoped, tag = 'input window, operand 1, single buffered']
    #allocation7 [shape = 'u8[4096]{0}', space=vmem, size = 0x1000, scoped, tag = 'output window, operand 0, single buffered']
    %7 = vsyncpa [#allocation5], 0
    %8 = vsyncpa [#allocation3], 0
    %9 = vsyncpa [#allocation4], 0
    // Predicated region
    $region2: #{tpu_custom_call.1} parent=1 // pred_check
      _
    $region3: #{tpu_custom_call.1} parent=1 // pred_check_branch
      %11 = sbr.rel (0) target = $region5
    $region4: #{tpu_custom_call.1} parent=1 // pred_region
      %s13 = ssub.s32 16, 16
      %14 = vsyncadd [#allocation5], %s13
      %17 = dma.hbm_to_smem %s0, 16, [#allocation2], [#allocation5]
    $region5: #{tpu_custom_call.1} parent=1 // pred_fallthru
      _
    // Predicated region
    $region6: #{tpu_custom_call.1} parent=1 // pred_check
      _
    $region7: #{tpu_custom_call.1} parent=1 // pred_check_branch
      %19 = sbr.rel (0) target = $region9
    $region8: #{tpu_custom_call.1} parent=1 // pred_region
      %s21 = ssub.s32 128, 128
      %22 = vsyncadd [#allocation3], %s21
      %s24 = sshll.u32 [#allocation6], 4
      %s25 = int_to_ptr.vmem [resolvable:$true] %s24
      %27 = dma.hbm_to_vmem [thread:$0]  %s1, 128, %s25, [#allocation3]
    $region9: #{tpu_custom_call.1} parent=1 // pred_fallthru
      _
    // Predicated region
    $region10: #{tpu_custom_call.1} parent=1 // pred_check
      _
    $region11: #{tpu_custom_call.1} parent=1 // pred_check_branch
      %29 = sbr.rel (0) target = $region13
    $region12: #{tpu_custom_call.1} parent=1 // pred_region
      %30 = dma.done [#allocation5], 16
    $region13: #{tpu_custom_call.1} parent=1 // pred_fallthru
      _
    // Predicated region
    $region14: #{tpu_custom_call.1} parent=1 // pred_check
      _
    $region15: #{tpu_custom_call.1} parent=1 // pred_check_branch
      %32 = sbr.rel (0) target = $region17
    $region16: #{tpu_custom_call.1} parent=1 // pred_region
      %33 = dma.done [#allocation3], 128
    $region17: #{tpu_custom_call.1} parent=1 // pred_fallthru
      _
    %34 = sfence
    %s35 = sld [smem:[#allocation2]]
    %s36 = sld [smem:[#allocation2 + $0x1]]
    %s37 = sld [smem:[#allocation2 + $0x2]]
    %s38 = sld [smem:[#allocation2 + $0x3]]
    %s39 = sld [smem:[#allocation2 + $0x4]]
    %s40 = sld [smem:[#allocation2 + $0x5]]
    %s41 = sld [smem:[#allocation2 + $0x6]]
    %s42 = sld [smem:[#allocation2 + $0x7]]
    %s43 = sld [smem:[#allocation2 + $0x8]]
    %s44 = sld [smem:[#allocation2 + $0x9]]
    %s45 = sld [smem:[#allocation2 + $0xa]]
    %s46 = sld [smem:[#allocation2 + $0xb]]
    %s47 = sld [smem:[#allocation2 + $0xc]]
    %v48 = vld [vmem:[#allocation6] sm:$0xff]
    %v49 = vstv %s35
    %v50 = vmul.f32 %v49, %v48
    %v51 = vstv %s37
    %v52 = vadd.f32 %v50, %v51
    %v53 = vstv %s36
    %v54 = vmul.f32 %v53, %v48
    %v55 = vstv %s38
    %v56 = vadd.f32 %v54, %v55
    %v57 = vstv %s39
    %v58 = vmul.f32 %v57, %v52
    %v59 = vstv %s41
    %v60 = vmul.f32 %v59, %v56
    %v61 = vadd.f32 %v58, %v60
    %v62 = vstv %s43
    %v63 = vadd.f32 %v61, %v62
    %v64 = vmul.f32 %v63, 0.5
    %v65 = vtanh.pop %v64
    %v66 = vmul.f32 %v65, 0.5
    %v67 = vadd.f32 %v66, 0.5
    %v68 = vstv %s40
    %v69 = vmul.f32 %v68, %v52
    %v70 = vstv %s42
    %v71 = vmul.f32 %v70, %v56
    %v72 = vadd.f32 %v69, %v71
    %v73 = vstv %s44
    %v74 = vadd.f32 %v72, %v73
    %v75 = vmul.f32 %v74, 0.5
    %v76 = vtanh.pop %v75
    %v77 = vmul.f32 %v76, 0.5
    %v78 = vadd.f32 %v77, 0.5
    %v79 = vstv %s45
    %v80 = vmul.f32 %v79, %v67
    %v81 = vstv %s46
    %v82 = vmul.f32 %v81, %v78
    %v83 = vadd.f32 %v80, %v82
    %v84 = vstv %s47
    %v85 = vadd.f32 %v83, %v84
    %86 = vst [vmem:[#allocation7] sm:$0xff] %v85
    // Predicated region
    $region18: #{tpu_custom_call.1} parent=1 // pred_check
      _
    $region19: #{tpu_custom_call.1} parent=1 // pred_check_branch
      %88 = sbr.rel (0) target = $region21
    $region20: #{tpu_custom_call.1} parent=1 // pred_region
      %s90 = ssub.s32 128, 128
      %91 = vsyncadd [#allocation4], %s90
      %s93 = sshll.u32 [#allocation7], 4
      %s94 = int_to_ptr.vmem [resolvable:$true] %s93
      %96 = dma.vmem_to_hbm [thread:$0]  %s94, 128, %s2, [#allocation4]
    $region21: #{tpu_custom_call.1} parent=1 // pred_fallthru
      _
    // Predicated region
    $region22: #{tpu_custom_call.1} parent=1 // pred_check
      _
    $region23: #{tpu_custom_call.1} parent=1 // pred_check_branch
      %98 = sbr.rel (0) target = $region25
    $region24: #{tpu_custom_call.1} parent=1 // pred_region
      %99 = dma.done [#allocation4], 128
    $region25: #{tpu_custom_call.1} parent=1 // pred_fallthru
      _
    %100 = vsyncpa [#allocation3], 1
    %101 = vsyncpa [#allocation4], 1
    %102 = vsyncpa [#allocation5], 1

</llo_original>
